<compile_context>
chip_gen: v7x
topology: tpu7x:2x2x1
jax: 0.10.0
libtpu: 0.0.40
codegen_flags: <defaults>
</compile_context>

<pallas_src>
import functools

import jax
import jax.numpy as jnp
from jax import lax
from jax.experimental import pallas as pl
from jax.experimental.pallas import tpu as pltpu

SUBLANE = 8     # f32 sublane tile (second-to-last dim)
CHUNK = 256     # in-kernel row sub-chunk: a (256, 64) f32 intermediate = 16 vregs


def _round_up(n, m):
    return ((n + m - 1) // m) * m


def _pad2(a, rows, cols):
    """Zero-pad a 2-D array up to (rows, cols); no-op (no copy) if already there."""
    pr, pc = rows - a.shape[0], cols - a.shape[1]
    if pr == 0 and pc == 0:
        return a
    return jnp.pad(a, ((0, pr), (0, pc)))


def qnet_kernel(x_ref, w1_ref, b1_ref, w2_ref, b2_ref, w3_ref, b3_ref, o_ref,
                *, chunk, compute_dtype):
    n_chunks = x_ref.shape[0] // chunk

    def body(i, carry):
        r = pl.multiple_of(i * chunk, chunk)
        # Cast the x rows to the MXU compute dtype in-kernel (VPU op, hidden).
        xb = x_ref[pl.ds(r, chunk), :].astype(compute_dtype)
        # Layer 1: Linear + ReLU (bf16 operands, f32 MXU accumulation).
        h1 = jnp.dot(xb, w1_ref[...], preferred_element_type=jnp.float32)
        h1 = jnp.maximum(h1 + b1_ref[...], 0.0)
        # Layer 2: Linear + ReLU.
        h2 = jnp.dot(h1.astype(compute_dtype), w2_ref[...],
                     preferred_element_type=jnp.float32)
        h2 = jnp.maximum(h2 + b2_ref[...], 0.0)
        # Layer 3: Linear (Q-values, no activation) -> unpadded (chunk, A) store.
        out = jnp.dot(h2.astype(compute_dtype), w3_ref[...],
                      preferred_element_type=jnp.float32)
        o_ref[pl.ds(r, chunk), :] = (out + b3_ref[...]).astype(o_ref.dtype)
        return carry

    # Fully unrolled short loop: keeps intermediates register-resident and
    # gives the LLO scheduler visibility to overlap chunks.
    lax.fori_loop(0, n_chunks, body, 0, unroll=True)


def qnetwork_forward(x, params, *, block_b=1024, compute_dtype=jnp.bfloat16):
    """x: (B, state_dim) f32.  params: (in, out) weights and (1, out) biases."""
    w1, b1 = params["w1"], params["b1"]
    w2, b2 = params["w2"], params["b2"]
    w3, b3 = params["w3"], params["b3"]

    B, S = x.shape
    H = w1.shape[1]
    A = w3.shape[1]

    # Feature dims stay unpadded (full-array blocks are always legal); only
    # x's columns / w1's rows are rounded to the 8-sublane tile if needed
    # (no-op for the common S % 8 == 0 case, so no extra HBM pass over x).
    S_p = _round_up(S, SUBLANE)

    # Batch block: multiple of 8 sublanes, multiple of the in-kernel chunk when
    # larger than it, and chosen so the grid has >= 2 steps (v7x: lets the
    # "parallel" batch axis split across both TensorCores).  Per-block VMEM is
    # tiny (<1 MiB even at TB=2048), far under every generation's budget.
    block_b = max(SUBLANE, _round_up(block_b, SUBLANE))
    n_blocks = max(pl.cdiv(B, block_b), 2)
    tb = min(block_b, _round_up(pl.cdiv(B, n_blocks), SUBLANE))
    if tb > CHUNK:
        tb = _round_up(tb, CHUNK)
        chunk = CHUNK
    else:
        chunk = tb
    b_p = max(_round_up(B, tb), 2 * tb)

    x_p = _pad2(x, b_p, S_p)                       # stays f32; cast in-kernel
    w1_p = _pad2(w1, S_p, H).astype(compute_dtype)
    w2_p = w2.astype(compute_dtype)
    w3_p = w3.astype(compute_dtype)

    vmem = pltpu.MemorySpace.VMEM
    # Weights / biases: full-array blocks, constant index map -> fetched once
    # and VMEM-resident across all batch blocks.
    const = lambda a: pl.BlockSpec(a.shape, lambda i: (0,) * a.ndim,
                                   memory_space=vmem)

    kernel = functools.partial(qnet_kernel, chunk=chunk,
                               compute_dtype=compute_dtype)

    out_p = pl.pallas_call(
        kernel,
        out_shape=jax.ShapeDtypeStruct((b_p, A), jnp.float32),
        grid=(b_p // tb,),
        in_specs=[
            pl.BlockSpec((tb, S_p), lambda i: (i, 0), memory_space=vmem),
            const(w1_p), const(b1),
            const(w2_p), const(b2),
            const(w3_p), const(b3),
        ],
        out_specs=pl.BlockSpec((tb, A), lambda i: (i, 0), memory_space=vmem),
        compiler_params=pltpu.CompilerParams(
            dimension_semantics=("parallel",)),  # batch axis over v7x's 2 TCs
    )(x_p, w1_p, b1, w2_p, b2, w3_p, b3)

    return out_p if b_p == B else out_p[:B]


def init_params(key, state_dim, action_dim, hidden_size=64):
    """Deterministic PyTorch-style init: U(-1/sqrt(fan_in), 1/sqrt(fan_in))."""
    def linear(key, fan_in, fan_out):
        kw, kb = jax.random.split(key)
        bound = 1.0 / jnp.sqrt(fan_in)
        w = jax.random.uniform(kw, (fan_in, fan_out), jnp.float32, -bound, bound)
        b = jax.random.uniform(kb, (1, fan_out), jnp.float32, -bound, bound)
        return w, b

    k1, k2, k3 = jax.random.split(key, 3)
    w1, b1 = linear(k1, state_dim, hidden_size)
    w2, b2 = linear(k2, hidden_size, hidden_size)
    w3, b3 = linear(k3, hidden_size, action_dim)
    return {"w1": w1, "b1": b1, "w2": w2, "b2": b2, "w3": w3, "b3": b3}


if __name__ == "__main__":
    key = jax.random.PRNGKey(0)
    kx, kp = jax.random.split(key)

    batch = 16
    state_dim = 8       # small state vector (e.g. an RL observation)
    action_dim = 4      # small discrete action space
    hidden_size = 64    # matches module default

    x = jax.random.normal(kx, (batch, state_dim), dtype=jnp.float32)
    params = init_params(kp, state_dim, action_dim, hidden_size)

    # Default block_b already yields a 2-step grid at this tiny batch
    # (TB = 8 rows per block), exercising the multi-block + megacore path.
    q_values = qnetwork_forward(x, params)
    q_values = jax.block_until_ready(q_values)
    assert q_values.shape == (batch, action_dim)
    assert q_values.dtype == jnp.float32

    # Reference 1: same bf16-operand / f32-accumulate recipe -> tight match.
    cd = jnp.bfloat16
    h1 = jnp.maximum(jnp.dot(x.astype(cd), params["w1"].astype(cd),
                             preferred_element_type=jnp.float32) + params["b1"], 0.0)
    h2 = jnp.maximum(jnp.dot(h1.astype(cd), params["w2"].astype(cd),
                             preferred_element_type=jnp.float32) + params["b2"], 0.0)
    ref_bf16 = jnp.dot(h2.astype(cd), params["w3"].astype(cd),
                       preferred_element_type=jnp.float32) + params["b3"]
    assert jnp.allclose(q_values, ref_bf16, atol=1e-4, rtol=1e-4)

    # Reference 2: pure f32 forward (the PyTorch module's semantics), checked
    # at bf16-level tolerance.
    h1f = jnp.maximum(x @ params["w1"] + params["b1"], 0.0)
    h2f = jnp.maximum(h1f @ params["w2"] + params["b2"], 0.0)
    ref_f32 = h2f @ params["w3"] + params["b3"]
    assert jnp.allclose(q_values, ref_f32, atol=5e-2, rtol=5e-2)

    print("KERNEL_OK")
</pallas_src>

<mosaic_0001>
module attributes {stable_mosaic.version = 11 : i64} {
  func.func @qnet_kernel(%arg0: i32, %arg1: memref<8x8xf32, #tpu.memory_space<vmem>>, %arg2: memref<8x64xbf16, #tpu.memory_space<vmem>>, %arg3: memref<1x64xf32, #tpu.memory_space<vmem>>, %arg4: memref<64x64xbf16, #tpu.memory_space<vmem>>, %arg5: memref<1x64xf32, #tpu.memory_space<vmem>>, %arg6: memref<64x4xbf16, #tpu.memory_space<vmem>>, %arg7: memref<1x4xf32, #tpu.memory_space<vmem>>, %arg8: memref<8x4xf32, #tpu.memory_space<vmem>>) attributes {dimension_semantics = [#tpu.dimension_semantics<parallel>], iteration_bounds = array<i64: 2>, scalar_prefetch = 0 : i64, scratch_operands = 0 : i64, tpu.core_type = #tpu.core_type<tc>, window_params = [{transform_indices = @transform_0, window_bounds = array<i64: 8, 8>}, {pipeline_mode = #tpu.pipeline_mode<synchronous>, transform_indices = @transform_1, window_bounds = array<i64: 8, 64>}, {pipeline_mode = #tpu.pipeline_mode<synchronous>, transform_indices = @transform_2, window_bounds = array<i64: 1, 64>}, {pipeline_mode = #tpu.pipeline_mode<synchronous>, transform_indices = @transform_3, window_bounds = array<i64: 64, 64>}, {pipeline_mode = #tpu.pipeline_mode<synchronous>, transform_indices = @transform_4, window_bounds = array<i64: 1, 64>}, {pipeline_mode = #tpu.pipeline_mode<synchronous>, transform_indices = @transform_5, window_bounds = array<i64: 64, 4>}, {pipeline_mode = #tpu.pipeline_mode<synchronous>, transform_indices = @transform_6, window_bounds = array<i64: 1, 4>}, {transform_indices = @transform_7, window_bounds = array<i64: 8, 4>}]} {
    %c0_i32 = arith.constant 0 : i32
    %c8_i32 = arith.constant 8 : i32
    %0 = arith.muli %c0_i32, %c8_i32 : i32
    %1 = tpu.assume_multiple %0, 8 : i32
    %2 = arith.index_cast %1 : i32 to index
    %c0 = arith.constant 0 : index
    %3 = vector.load %arg1[%2, %c0] : memref<8x8xf32, #tpu.memory_space<vmem>>, vector<8x8xf32>
    %4 = arith.truncf %3 : vector<8x8xf32> to vector<8x8xbf16>
    %c0_0 = arith.constant 0 : index
    %c0_1 = arith.constant 0 : index
    %5 = vector.load %arg2[%c0_0, %c0_1] : memref<8x64xbf16, #tpu.memory_space<vmem>>, vector<8x64xbf16>
    %cst = arith.constant dense<0.000000e+00> : vector<8x64xf32>
    %6 = tpu.matmul %4, %5, %cst {dimension_numbers = #tpu.dot_dimension_numbers<[1], [0], [0], [1], [0, 0, 1, 1], [], []>} : vector<8x8xbf16>, vector<8x64xbf16>, vector<8x64xf32> -> vector<8x64xf32>
    %c0_2 = arith.constant 0 : index
    %c0_3 = arith.constant 0 : index
    %7 = vector.load %arg3[%c0_2, %c0_3] : memref<1x64xf32, #tpu.memory_space<vmem>>, vector<1x64xf32>
    %8 = vector.broadcast %7 : vector<1x64xf32> to vector<8x64xf32>
    %9 = arith.addf %6, %8 : vector<8x64xf32>
    %cst_4 = arith.constant 0.000000e+00 : f32
    %10 = vector.broadcast %cst_4 : f32 to vector<8x64xf32>
    %11 = arith.maximumf %9, %10 : vector<8x64xf32>
    %12 = arith.truncf %11 : vector<8x64xf32> to vector<8x64xbf16>
    %c0_5 = arith.constant 0 : index
    %c0_6 = arith.constant 0 : index
    %13 = vector.load %arg4[%c0_5, %c0_6] : memref<64x64xbf16, #tpu.memory_space<vmem>>, vector<64x64xbf16>
    %cst_7 = arith.constant dense<0.000000e+00> : vector<8x64xf32>
    %14 = tpu.matmul %12, %13, %cst_7 {dimension_numbers = #tpu.dot_dimension_numbers<[1], [0], [0], [1], [0, 0, 1, 1], [], []>} : vector<8x64xbf16>, vector<64x64xbf16>, vector<8x64xf32> -> vector<8x64xf32>
    %c0_8 = arith.constant 0 : index
    %c0_9 = arith.constant 0 : index
    %15 = vector.load %arg5[%c0_8, %c0_9] : memref<1x64xf32, #tpu.memory_space<vmem>>, vector<1x64xf32>
    %16 = vector.broadcast %15 : vector<1x64xf32> to vector<8x64xf32>
    %17 = arith.addf %14, %16 : vector<8x64xf32>
    %cst_10 = arith.constant 0.000000e+00 : f32
    %18 = vector.broadcast %cst_10 : f32 to vector<8x64xf32>
    %19 = arith.maximumf %17, %18 : vector<8x64xf32>
    %20 = arith.truncf %19 : vector<8x64xf32> to vector<8x64xbf16>
    %c0_11 = arith.constant 0 : index
    %c0_12 = arith.constant 0 : index
    %21 = vector.load %arg6[%c0_11, %c0_12] : memref<64x4xbf16, #tpu.memory_space<vmem>>, vector<64x4xbf16>
    %cst_13 = arith.constant dense<0.000000e+00> : vector<8x4xf32>
    %22 = tpu.matmul %20, %21, %cst_13 {dimension_numbers = #tpu.dot_dimension_numbers<[1], [0], [0], [1], [0, 0, 1, 1], [], []>} : vector<8x64xbf16>, vector<64x4xbf16>, vector<8x4xf32> -> vector<8x4xf32>
    %c0_14 = arith.constant 0 : index
    %c0_15 = arith.constant 0 : index
    %23 = vector.load %arg7[%c0_14, %c0_15] : memref<1x4xf32, #tpu.memory_space<vmem>>, vector<1x4xf32>
    %24 = vector.broadcast %23 : vector<1x4xf32> to vector<8x4xf32>
    %25 = arith.addf %22, %24 : vector<8x4xf32>
    %26 = arith.index_cast %1 : i32 to index
    %c0_16 = arith.constant 0 : index
    %27 = vector.load %arg8[%26, %c0_16] : memref<8x4xf32, #tpu.memory_space<vmem>>, vector<8x4xf32>
    tpu.vector_store %arg8[%26, %c0_16], %25 {strides = array<i32>} : memref<8x4xf32, #tpu.memory_space<vmem>>, vector<8x4xf32>,
    %c1_i32 = arith.constant 1 : i32
    return
  }
  func.func @transform_0(%arg0: i32) -> (i32, i32) {
    %c0_i32 = arith.constant 0 : i32
    %c0_i32_0 = arith.constant 0 : i32
    return %arg0, %c0_i32 : i32, i32
  }
  func.func @transform_1(%arg0: i32) -> (i32, i32) {
    %c0_i32 = arith.constant 0 : i32
    %c0_i32_0 = arith.constant 0 : i32
    %c0_i32_1 = arith.constant 0 : i32
    return %c0_i32, %c0_i32_0 : i32, i32
  }
  func.func @transform_2(%arg0: i32) -> (i32, i32) {
    %c0_i32 = arith.constant 0 : i32
    %c0_i32_0 = arith.constant 0 : i32
    %c0_i32_1 = arith.constant 0 : i32
    return %c0_i32, %c0_i32_0 : i32, i32
  }
  func.func @transform_3(%arg0: i32) -> (i32, i32) {
    %c0_i32 = arith.constant 0 : i32
    %c0_i32_0 = arith.constant 0 : i32
    %c0_i32_1 = arith.constant 0 : i32
    return %c0_i32, %c0_i32_0 : i32, i32
  }
  func.func @transform_4(%arg0: i32) -> (i32, i32) {
    %c0_i32 = arith.constant 0 : i32
    %c0_i32_0 = arith.constant 0 : i32
    %c0_i32_1 = arith.constant 0 : i32
    return %c0_i32, %c0_i32_0 : i32, i32
  }
  func.func @transform_5(%arg0: i32) -> (i32, i32) {
    %c0_i32 = arith.constant 0 : i32
    %c0_i32_0 = arith.constant 0 : i32
    %c0_i32_1 = arith.constant 0 : i32
    return %c0_i32, %c0_i32_0 : i32, i32
  }
  func.func @transform_6(%arg0: i32) -> (i32, i32) {
    %c0_i32 = arith.constant 0 : i32
    %c0_i32_0 = arith.constant 0 : i32
    %c0_i32_1 = arith.constant 0 : i32
    return %c0_i32, %c0_i32_0 : i32, i32
  }
  func.func @transform_7(%arg0: i32) -> (i32, i32) {
    %c0_i32 = arith.constant 0 : i32
    %c0_i32_0 = arith.constant 0 : i32
    return %arg0, %c0_i32 : i32, i32
  }
}

</mosaic_0001>

<llo_original>
// kernel: tpu_custom_call.1
$region0: #{tpu_custom_call.1}
  #allocation0 [shape = 'u32[]', space=smem, size = 0x4, offset = 0x4, fixed_abs, tag = 'smem constant byte address 0x4 - core index']
  #allocation1 [shape = 'u32[144,128]{1,0:T(1,128)}', space=vmem, size = 0x12000, scoped, tag = 'internal scratch']
  %s0 = inlined_call_operand.vmem [shape: f32[16,8], index: 0, kind: input, shape index: {}]
  %s1 = inlined_call_operand.vmem [shape: bf16[8,64], index: 1, kind: input, shape index: {}]
  %s2 = inlined_call_operand.vmem [shape: f32[1,64], index: 2, kind: input, shape index: {}]
  %s3 = inlined_call_operand.vmem [shape: bf16[64,64], index: 3, kind: input, shape index: {}]
  %s4 = inlined_call_operand.vmem [shape: f32[1,64], index: 4, kind: input, shape index: {}]
  %s5 = inlined_call_operand.vmem [shape: bf16[64,4], index: 5, kind: input, shape index: {}]
  %s6 = inlined_call_operand.vmem [shape: f32[1,4], index: 6, kind: input, shape index: {}]
  %s7 = inlined_call_operand.vmem [shape: f32[16,4], index: 7, kind: output, shape index: {}]
  %s8 = sld [smem:[#allocation0]]
  $region61: #{tpu_custom_call.1} parent=0
    _
  %s10 = ssub.s32 1, %s8
  %s11 = scalar_select 0, %s10, %s8
  loop: start=0, step=1, limit=4
  $region2: #{tpu_custom_call.1} parent=0 // loop_pre_header
    _
  $region3: #{tpu_custom_call.1} parent=0 // loop_header
    %s13 = sphi 0, %s17
    %p14 = scmp.ge.s32.totalorder %s13, 4
    %s23 = sphi 0, %s25
    %s26 = sphi 0, %s23
    %s27 = sphi 0, %s26
    %s43 = sphi 0, %s27
    %s47 = sphi 0, %s47
    %s49 = sphi 0, %s47
    %s50 = sphi 0, %s49
    %s64 = sphi 0, %s50
    %s68 = sphi 0, %s68
    %s70 = sphi 0, %s68
    %s71 = sphi 0, %s70
    %s85 = sphi 0, %s71
    %s89 = sphi 0, %s89
    %s91 = sphi 0, %s89
    %s92 = sphi 0, %s91
    %s106 = sphi 0, %s92
    %s110 = sphi 0, %s110
    %s112 = sphi 0, %s110
    %s113 = sphi 0, %s112
    %s127 = sphi 0, %s113
    %s131 = sphi 0, %s131
    %s133 = sphi 0, %s131
    %s134 = sphi 0, %s133
    %s148 = sphi 0, %s134
    %s152 = sphi 0, %s152
    %s154 = sphi 0, %s152
    %s155 = sphi 0, %s154
    %s169 = sphi 0, %s155
    %s175 = sphi 0, %s177
    %s178 = sphi 0, %s175
    %s179 = sphi 0, %s178
    %s195 = sphi 0, %s179
  $region4: #{tpu_custom_call.1} parent=0 // loop_header_branch
    %16 = sbr.rel (%p14) target = $region8
  $region5: #{tpu_custom_call.1} parent=0 // loop_body
    %s18 = ssub.s32 %s13, 1
    %s19 = ssub.s32 %s13, 2
    %s20 = sadd.s32 %s13, 1
    %s21 = ssub.s32 %s13, %s20
    %p22 = scmp.eq.s32.totalorder %s21, 0
    %s24 = sadd.s32 %s23, 1
    %s25 = scalar_select %p22, %s23, %s24
    %p28 = pneg %p22
    %p29 = scmp.eq.s32.totalorder %s13, 1
    %p30 = por %p28, %p29
    %p31 = scmp.ne.s32.totalorder %s23, %s26
    %p32 = scmp.eq.s32.totalorder %s13, 0
    %p33 = por %p31, %p32
    %p34 = scmp.ne.s32.totalorder %s23, %s26
    %p35 = scmp.eq.s32.totalorder %s18, 1
    %p36 = por %p34, %p35
    %p37 = scmp.ne.s32.totalorder %s26, %s27
    %p38 = scmp.eq.s32.totalorder %s18, 0
    %p39 = por %p37, %p38
    %p40 = scmp.ne.s32.totalorder %s26, %s27
    %p41 = scmp.eq.s32.totalorder %s19, 1
    %p42 = por %p40, %p41
    %p44 = scmp.ne.s32.totalorder %s27, %s43
    %p45 = scmp.eq.s32.totalorder %s19, 0
    %p46 = por %p44, %p45
    %s48 = sadd.s32 %s47, 1
    %p51 = scmp.eq.s32.totalorder %s13, 1
    %p52 = scmp.ne.s32.totalorder %s47, %s49
    %p53 = scmp.eq.s32.totalorder %s13, 0
    %p54 = por %p52, %p53
    %p55 = scmp.ne.s32.totalorder %s47, %s49
    %p56 = scmp.eq.s32.totalorder %s18, 1
    %p57 = por %p55, %p56
    %p58 = scmp.ne.s32.totalorder %s49, %s50
    %p59 = scmp.eq.s32.totalorder %s18, 0
    %p60 = por %p58, %p59
    %p61 = scmp.ne.s32.totalorder %s49, %s50
    %p62 = scmp.eq.s32.totalorder %s19, 1
    %p63 = por %p61, %p62
    %p65 = scmp.ne.s32.totalorder %s50, %s64
    %p66 = scmp.eq.s32.totalorder %s19, 0
    %p67 = por %p65, %p66
    %s69 = sadd.s32 %s68, 1
    %p72 = scmp.eq.s32.totalorder %s13, 1
    %p73 = scmp.ne.s32.totalorder %s68, %s70
    %p74 = scmp.eq.s32.totalorder %s13, 0
    %p75 = por %p73, %p74
    %p76 = scmp.ne.s32.totalorder %s68, %s70
    %p77 = scmp.eq.s32.totalorder %s18, 1
    %p78 = por %p76, %p77
    %p79 = scmp.ne.s32.totalorder %s70, %s71
    %p80 = scmp.eq.s32.totalorder %s18, 0
    %p81 = por %p79, %p80
    %p82 = scmp.ne.s32.totalorder %s70, %s71
    %p83 = scmp.eq.s32.totalorder %s19, 1
    %p84 = por %p82, %p83
    %p86 = scmp.ne.s32.totalorder %s71, %s85
    %p87 = scmp.eq.s32.totalorder %s19, 0
    %p88 = por %p86, %p87
    %s90 = sadd.s32 %s89, 1
    %p93 = scmp.eq.s32.totalorder %s13, 1
    %p94 = scmp.ne.s32.totalorder %s89, %s91
    %p95 = scmp.eq.s32.totalorder %s13, 0
    %p96 = por %p94, %p95
    %p97 = scmp.ne.s32.totalorder %s89, %s91
    %p98 = scmp.eq.s32.totalorder %s18, 1
    %p99 = por %p97, %p98
    %p100 = scmp.ne.s32.totalorder %s91, %s92
    %p101 = scmp.eq.s32.totalorder %s18, 0
    %p102 = por %p100, %p101
    %p103 = scmp.ne.s32.totalorder %s91, %s92
    %p104 = scmp.eq.s32.totalorder %s19, 1
    %p105 = por %p103, %p104
    %p107 = scmp.ne.s32.totalorder %s92, %s106
    %p108 = scmp.eq.s32.totalorder %s19, 0
    %p109 = por %p107, %p108
    %s111 = sadd.s32 %s110, 1
    %p114 = scmp.eq.s32.totalorder %s13, 1
    %p115 = scmp.ne.s32.totalorder %s110, %s112
    %p116 = scmp.eq.s32.totalorder %s13, 0
    %p117 = por %p115, %p116
    %p118 = scmp.ne.s32.totalorder %s110, %s112
    %p119 = scmp.eq.s32.totalorder %s18, 1
    %p120 = por %p118, %p119
    %p121 = scmp.ne.s32.totalorder %s112, %s113
    %p122 = scmp.eq.s32.totalorder %s18, 0
    %p123 = por %p121, %p122
    %p124 = scmp.ne.s32.totalorder %s112, %s113
    %p125 = scmp.eq.s32.totalorder %s19, 1
    %p126 = por %p124, %p125
    %p128 = scmp.ne.s32.totalorder %s113, %s127
    %p129 = scmp.eq.s32.totalorder %s19, 0
    %p130 = por %p128, %p129
    %s132 = sadd.s32 %s131, 1
    %p135 = scmp.eq.s32.totalorder %s13, 1
    %p136 = scmp.ne.s32.totalorder %s131, %s133
    %p137 = scmp.eq.s32.totalorder %s13, 0
    %p138 = por %p136, %p137
    %p139 = scmp.ne.s32.totalorder %s131, %s133
    %p140 = scmp.eq.s32.totalorder %s18, 1
    %p141 = por %p139, %p140
    %p142 = scmp.ne.s32.totalorder %s133, %s134
    %p143 = scmp.eq.s32.totalorder %s18, 0
    %p144 = por %p142, %p143
    %p145 = scmp.ne.s32.totalorder %s133, %s134
    %p146 = scmp.eq.s32.totalorder %s19, 1
    %p147 = por %p145, %p146
    %p149 = scmp.ne.s32.totalorder %s134, %s148
    %p150 = scmp.eq.s32.totalorder %s19, 0
    %p151 = por %p149, %p150
    %s153 = sadd.s32 %s152, 1
    %p156 = scmp.eq.s32.totalorder %s13, 1
    %p157 = scmp.ne.s32.totalorder %s152, %s154
    %p158 = scmp.eq.s32.totalorder %s13, 0
    %p159 = por %p157, %p158
    %p160 = scmp.ne.s32.totalorder %s152, %s154
    %p161 = scmp.eq.s32.totalorder %s18, 1
    %p162 = por %p160, %p161
    %p163 = scmp.ne.s32.totalorder %s154, %s155
    %p164 = scmp.eq.s32.totalorder %s18, 0
    %p165 = por %p163, %p164
    %p166 = scmp.ne.s32.totalorder %s154, %s155
    %p167 = scmp.eq.s32.totalorder %s19, 1
    %p168 = por %p166, %p167
    %p170 = scmp.ne.s32.totalorder %s155, %s169
    %p171 = scmp.eq.s32.totalorder %s19, 0
    %p172 = por %p170, %p171
    %s173 = ssub.s32 %s13, %s20
    %p174 = scmp.eq.s32.totalorder %s173, 0
    %s176 = sadd.s32 %s175, 1
    %s177 = scalar_select %p174, %s175, %s176
    %p180 = pneg %p174
    %p181 = scmp.eq.s32.totalorder %s13, 1
    %p182 = por %p180, %p181
    %p183 = scmp.ne.s32.totalorder %s175, %s178
    %p184 = scmp.eq.s32.totalorder %s13, 0
    %p185 = por %p183, %p184
    %p186 = scmp.ne.s32.totalorder %s175, %s178
    %p187 = scmp.eq.s32.totalorder %s18, 1
    %p188 = por %p186, %p187
    %p189 = scmp.ne.s32.totalorder %s178, %s179
    %p190 = scmp.eq.s32.totalorder %s18, 0
    %p191 = por %p189, %p190
    %p192 = scmp.ne.s32.totalorder %s178, %s179
    %p193 = scmp.eq.s32.totalorder %s19, 1
    %p194 = por %p192, %p193
    %p196 = scmp.ne.s32.totalorder %s179, %s195
    %p197 = scmp.eq.s32.totalorder %s19, 0
    %p198 = por %p196, %p197
    %p199 = scmp.le.s32.totalorder 1, %s13
    %p200 = scmp.lt.s32.totalorder %s13, 3
    %p201 = pnand %p199, %p200
    %p202 = pneg %p201
    // Predicated region
    $region9: #{tpu_custom_call.1} parent=5 // pred_check
      _
    $region10: #{tpu_custom_call.1} parent=5 // pred_check_branch
      %204 = sbr.rel (%p201) target = $region12
    $region11: #{tpu_custom_call.1} parent=5 // pred_region
      %s205 = ssub.s32 %s13, 1
      // Predicated region
      $region13: #{tpu_custom_call.1} parent=11 // pred_check
        %p206 = pneg %p60
      $region14: #{tpu_custom_call.1} parent=11 // pred_check_branch
        %208 = sbr.rel (%p206) target = $region16
      $region15: #{tpu_custom_call.1} parent=11 // pred_region
        _
      $region16: #{tpu_custom_call.1} parent=11 // pred_fallthru
        _
      // Predicated region
      $region17: #{tpu_custom_call.1} parent=11 // pred_check
        %p209 = pneg %p81
      $region18: #{tpu_custom_call.1} parent=11 // pred_check_branch
        %211 = sbr.rel (%p209) target = $region20
      $region19: #{tpu_custom_call.1} parent=11 // pred_region
        _
      $region20: #{tpu_custom_call.1} parent=11 // pred_fallthru
        _
      // Predicated region
      $region21: #{tpu_custom_call.1} parent=11 // pred_check
        %p212 = pneg %p102
      $region22: #{tpu_custom_call.1} parent=11 // pred_check_branch
        %214 = sbr.rel (%p212) target = $region24
      $region23: #{tpu_custom_call.1} parent=11 // pred_region
        _
      $region24: #{tpu_custom_call.1} parent=11 // pred_fallthru
        _
      // Predicated region
      $region25: #{tpu_custom_call.1} parent=11 // pred_check
        %p215 = pneg %p123
      $region26: #{tpu_custom_call.1} parent=11 // pred_check_branch
        %217 = sbr.rel (%p215) target = $region28
      $region27: #{tpu_custom_call.1} parent=11 // pred_region
        _
      $region28: #{tpu_custom_call.1} parent=11 // pred_fallthru
        _
      // Predicated region
      $region29: #{tpu_custom_call.1} parent=11 // pred_check
        %p218 = pneg %p144
      $region30: #{tpu_custom_call.1} parent=11 // pred_check_branch
        %220 = sbr.rel (%p218) target = $region32
      $region31: #{tpu_custom_call.1} parent=11 // pred_region
        _
      $region32: #{tpu_custom_call.1} parent=11 // pred_fallthru
        _
      // Predicated region
      $region33: #{tpu_custom_call.1} parent=11 // pred_check
        %p221 = pneg %p165
      $region34: #{tpu_custom_call.1} parent=11 // pred_check_branch
        %223 = sbr.rel (%p221) target = $region36
      $region35: #{tpu_custom_call.1} parent=11 // pred_region
        _
      $region36: #{tpu_custom_call.1} parent=11 // pred_fallthru
        _
    $region12: #{tpu_custom_call.1} parent=5 // pred_fallthru
      _
    %p224 = scmp.lt.s32.totalorder %s13, 2
    // Predicated region
    $region37: #{tpu_custom_call.1} parent=5 // pred_check
      %p225 = pneg %p224
    $region38: #{tpu_custom_call.1} parent=5 // pred_check_branch
      %227 = sbr.rel (%p225) target = $region40
    $region39: #{tpu_custom_call.1} parent=5 // pred_region
      // Predicated region
      $region41: #{tpu_custom_call.1} parent=39 // pred_check
        %p228 = pneg %p33
      $region42: #{tpu_custom_call.1} parent=39 // pred_check_branch
        %230 = sbr.rel (%p228) target = $region44
      $region43: #{tpu_custom_call.1} parent=39 // pred_region
        %p231 = scmp.lt.s32.totalorder %s13, 1
        %s232 = scalar_select %p231, %s13, 1
        %s233 = smul.addr %s232, 8
        %s234 = scalar_lea.vmem %s0, %s233
      $region44: #{tpu_custom_call.1} parent=39 // pred_fallthru
        _
    $region40: #{tpu_custom_call.1} parent=5 // pred_fallthru
      _
    %p235 = scmp.le.s32.totalorder 1, %s13
    %p236 = scmp.lt.s32.totalorder %s13, 3
    %p237 = pnand %p235, %p236
    %p238 = pneg %p237
    // Predicated region
    $region45: #{tpu_custom_call.1} parent=5 // pred_check
      _
    $region46: #{tpu_custom_call.1} parent=5 // pred_check_branch
      %240 = sbr.rel (%p237) target = $region48
    $region47: #{tpu_custom_call.1} parent=5 // pred_region
      %s241 = ssub.s32 %s13, 1
      %p242 = scmp.lt.s32.totalorder %s18, 1
      %s243 = scalar_select %p242, %s18, 1
      %s244 = smul.addr %s243, 8
      %s245 = scalar_lea.vmem %s0, %s244
      %p246 = pneg %p39
      %p247 = pneg %p36
      %p248 = pneg %p60
      %p249 = pneg %p57
      %p250 = pneg %p81
      %p251 = pneg %p78
      %p252 = pneg %p102
      %p253 = pneg %p99
      %p254 = pneg %p123
      %p255 = pneg %p120
      %p256 = pneg %p144
      %p257 = pneg %p141
      %p258 = pneg %p165
      %p259 = pneg %p162
      %p260 = pneg %p191
      %p261 = pneg %p188
      %p262 = scmp.lt.s32.totalorder %s18, 1
      %s263 = scalar_select %p262, %s18, 1
      %s264 = smul.addr %s263, 8
      %s265 = scalar_lea.vmem %s7, %s264
      %p266 = scmp.lt.s32.totalorder %s18, 1
      %s267 = scalar_select %p266, %s18, 1
      %s268 = smul.addr %s267, 8
      %s269 = scalar_lea.vmem %s0, %s268
      %p270 = scmp.lt.s32.totalorder %s18, 1
      %s271 = scalar_select %p270, %s18, 1
      %s272 = smul.addr %s271, 8
      %s273 = scalar_lea.vmem %s7, %s272
      %v275 = vld [vmem:[%s269] sm:$0xff]
      %v276 = vpack.c.bf16 %v275, %v275
      %v277 = vld [vmem:[%s1] sm:$0xf]
      %v278 = vld [vmem:[%s2] sm:$0x1]
      %v280 = vlaneseq
      %v281 = vshrl.u32 %v280, 7
      %v282 = vsub.s32 0, %v281
      %v283 = vrot.slane %v278, %v282
      %vm285 = vcmask 64512
      %v287 = vsel %vm285, %v276, 0
      %vm289 = vcmask 1043456
      %v291 = vsel %vm289, %v277, 0
      %293 = vmatprep.subr.bf16.mxu0 0
      %294 = vmatpush1.bf16.msra.mxu0 %v291
      %295 = vmatprep.subr.bf16.mxu0 0
      %296 = vmatpush1.bf16.msra.mxu0 0
      %297 = vmatprep.subr.bf16.mxu0 0
      %298 = vmatpush1.bf16.msra.mxu0 0
      %299 = vmatprep.subr.bf16.mxu0 0
      %300 = vmatpush1.bf16.msra.mxu0 0
      %301 = vmatprep.subr.bf16.mxu0 0
      %302 = vmatpush1.bf16.msra.mxu0 0
      %303 = vmatprep.subr.bf16.mxu0 0
      %304 = vmatpush1.bf16.msra.mxu0 0
      %305 = vmatprep.subr.bf16.mxu0 0
      %306 = vmatpush1.bf16.msra.mxu0 0
      %307 = vmatprep.subr.bf16.mxu0 0
      %308 = vmatpush1.bf16.msra.mxu0 0
      %309 = vmatprep.subr.bf16.mxu0 0
      %310 = vmatpush1.bf16.msra.mxu0 0
      %311 = vmatprep.subr.bf16.mxu0 0
      %312 = vmatpush1.bf16.msra.mxu0 0
      %313 = vmatprep.subr.bf16.mxu0 0
      %314 = vmatpush1.bf16.msra.mxu0 0
      %315 = vmatprep.subr.bf16.mxu0 0
      %316 = vmatpush1.bf16.msra.mxu0 0
      %317 = vmatprep.subr.bf16.mxu0 0
      %318 = vmatpush1.bf16.msra.mxu0 0
      %319 = vmatprep.subr.bf16.mxu0 0
      %320 = vmatpush1.bf16.msra.mxu0 0
      %321 = vmatprep.subr.bf16.mxu0 0
      %322 = vmatpush1.bf16.msra.mxu0 0
      %323 = vmatprep.subr.bf16.mxu0 0
      %324 = vmatpush1.bf16.msra.mxu0 0
      %325 = vmatprep.mubr.bf16.mxu0 0
      %326 = vmatmul.mubr.bf16.gmra.mrb[0].mxu0 %v287
      %v327 = vpop.f32.mrb[0].mxu0
      %v328 = vadd.f32 %v283, %v327
      %v329 = vpop.f32.mrb[0].mxu0
      %v330 = vpop.f32.mrb[0].mxu0
      %v331 = vpop.f32.mrb[0].mxu0
      %332 = vdwg.mxu0
      %v333 = vmax.f32 %v328, 0.0
      %v334 = vpack.c.bf16 %v333, %v333
      %v335 = vld [vmem:[%s3] sm:$0xf]
      %v336 = vld [vmem:[%s3 + $0x4] sm:$0xf]
      %v337 = vld [vmem:[%s3 + $0x8] sm:$0xf]
      %v338 = vld [vmem:[%s3 + $0xc] sm:$0xf]
      %v339 = vld [vmem:[%s3 + $0x10] sm:$0xf]
      %v340 = vld [vmem:[%s3 + $0x14] sm:$0xf]
      %v341 = vld [vmem:[%s3 + $0x18] sm:$0xf]
      %v342 = vld [vmem:[%s3 + $0x1c] sm:$0xf]
      %v343 = vld [vmem:[%s4] sm:$0x1]
      %v345 = vlaneseq
      %v346 = vshrl.u32 %v345, 7
      %v347 = vsub.s32 0, %v346
      %v348 = vrot.slane %v343, %v347
      %v358 = vunpack.c.l.b16 %v335
      %v359 = vunpack.c.l.b16 %v336
      %v360 = vunpack.c.l.b16 %v337
      %v361 = vunpack.c.l.b16 %v338
      %v362 = vunpack.c.l.b16 %v339
      %v363 = vunpack.c.l.b16 %v340
      %v364 = vunpack.c.l.b16 %v341
      %v365 = vunpack.c.l.b16 %v342
      %v366 = vpack.c.b16 %v359, %v358
      %v367 = vpack.c.b16 %v361, %v360
      %v368 = vpack.c.b16 %v363, %v362
      %v369 = vpack.c.b16 %v365, %v364
      %vm374 = vcmask 523264
      %v376 = vsel %vm374, %v334, 0
      %378 = vmatprep.subr.bf16.mxu0 0
      %379 = vmatpush1.bf16.msra.mxu0 %v366
      %380 = vmatprep.subr.bf16.mxu0 0
      %381 = vmatpush1.bf16.msra.mxu0 %v367
      %382 = vmatprep.subr.bf16.mxu0 0
      %383 = vmatpush1.bf16.msra.mxu0 %v368
      %384 = vmatprep.subr.bf16.mxu0 0
      %385 = vmatpush1.bf16.msra.mxu0 %v369
      %386 = vmatprep.subr.bf16.mxu0 0
      %387 = vmatpush1.bf16.msra.mxu0 0
      %388 = vmatprep.subr.bf16.mxu0 0
      %389 = vmatpush1.bf16.msra.mxu0 0
      %390 = vmatprep.subr.bf16.mxu0 0
      %391 = vmatpush1.bf16.msra.mxu0 0
      %392 = vmatprep.subr.bf16.mxu0 0
      %393 = vmatpush1.bf16.msra.mxu0 0
      %394 = vmatprep.subr.bf16.mxu0 0
      %395 = vmatpush1.bf16.msra.mxu0 0
      %396 = vmatprep.subr.bf16.mxu0 0
      %397 = vmatpush1.bf16.msra.mxu0 0
      %398 = vmatprep.subr.bf16.mxu0 0
      %399 = vmatpush1.bf16.msra.mxu0 0
      %400 = vmatprep.subr.bf16.mxu0 0
      %401 = vmatpush1.bf16.msra.mxu0 0
      %402 = vmatprep.subr.bf16.mxu0 0
      %403 = vmatpush1.bf16.msra.mxu0 0
      %404 = vmatprep.subr.bf16.mxu0 0
      %405 = vmatpush1.bf16.msra.mxu0 0
      %406 = vmatprep.subr.bf16.mxu0 0
      %407 = vmatpush1.bf16.msra.mxu0 0
      %408 = vmatprep.subr.bf16.mxu0 0
      %409 = vmatpush1.bf16.msra.mxu0 0
      %410 = vmatprep.mubr.bf16.mxu0 0
      %411 = vmatmul.mubr.bf16.gmra.mrb[0].mxu0 %v376
      %v412 = vpop.f32.mrb[0].mxu0
      %v413 = vadd.f32 %v348, %v412
      %v414 = vpop.f32.mrb[0].mxu0
      %v415 = vpop.f32.mrb[0].mxu0
      %v416 = vpop.f32.mrb[0].mxu0
      %417 = vdwg.mxu0
      %v418 = vmax.f32 %v413, 0.0
      %v419 = vpack.c.bf16 %v418, %v418
      %v420 = vld [vmem:[%s5] sm:$0xf]
      %v421 = vld [vmem:[%s5 + $0x4] sm:$0xf]
      %v422 = vld [vmem:[%s5 + $0x8] sm:$0xf]
      %v423 = vld [vmem:[%s5 + $0xc] sm:$0xf]
      %v424 = vld [vmem:[%s5 + $0x10] sm:$0xf]
      %v425 = vld [vmem:[%s5 + $0x14] sm:$0xf]
      %v426 = vld [vmem:[%s5 + $0x18] sm:$0xf]
      %v427 = vld [vmem:[%s5 + $0x1c] sm:$0xf]
      %v428 = vld [vmem:[%s6] sm:$0x1]
      %v430 = vlaneseq
      %v431 = vshrl.u32 %v430, 7
      %v432 = vsub.s32 0, %v431
      %v433 = vrot.slane %v428, %v432
      %v443 = vunpack.c.l.b16 %v420
      %v444 = vunpack.c.l.b16 %v421
      %v445 = vunpack.c.l.b16 %v422
      %v446 = vunpack.c.l.b16 %v423
      %v447 = vunpack.c.l.b16 %v424
      %v448 = vunpack.c.l.b16 %v425
      %v449 = vunpack.c.l.b16 %v426
      %v450 = vunpack.c.l.b16 %v427
      %v451 = vpack.c.b16 %v444, %v443
      %v452 = vpack.c.b16 %v446, %v445
      %v453 = vpack.c.b16 %v448, %v447
      %v454 = vpack.c.b16 %v450, %v449
      %v460 = vsel %vm374, %v419, 0
      %462 = vmatprep.subr.bf16.mxu0 0
      %463 = vmatpush1.bf16.msra.mxu0 %v451
      %464 = vmatprep.subr.bf16.mxu0 0
      %465 = vmatpush1.bf16.msra.mxu0 %v452
      %466 = vmatprep.subr.bf16.mxu0 0
      %467 = vmatpush1.bf16.msra.mxu0 %v453
      %468 = vmatprep.subr.bf16.mxu0 0
      %469 = vmatpush1.bf16.msra.mxu0 %v454
      %470 = vmatprep.subr.bf16.mxu0 0
      %471 = vmatpush1.bf16.msra.mxu0 0
      %472 = vmatprep.subr.bf16.mxu0 0
      %473 = vmatpush1.bf16.msra.mxu0 0
      %474 = vmatprep.subr.bf16.mxu0 0
      %475 = vmatpush1.bf16.msra.mxu0 0
      %476 = vmatprep.subr.bf16.mxu0 0
      %477 = vmatpush1.bf16.msra.mxu0 0
      %478 = vmatprep.subr.bf16.mxu0 0
      %479 = vmatpush1.bf16.msra.mxu0 0
      %480 = vmatprep.subr.bf16.mxu0 0
      %481 = vmatpush1.bf16.msra.mxu0 0
      %482 = vmatprep.subr.bf16.mxu0 0
      %483 = vmatpush1.bf16.msra.mxu0 0
      %484 = vmatprep.subr.bf16.mxu0 0
      %485 = vmatpush1.bf16.msra.mxu0 0
      %486 = vmatprep.subr.bf16.mxu0 0
      %487 = vmatpush1.bf16.msra.mxu0 0
      %488 = vmatprep.subr.bf16.mxu0 0
      %489 = vmatpush1.bf16.msra.mxu0 0
      %490 = vmatprep.subr.bf16.mxu0 0
      %491 = vmatpush1.bf16.msra.mxu0 0
      %492 = vmatprep.subr.bf16.mxu0 0
      %493 = vmatpush1.bf16.msra.mxu0 0
      %494 = vmatprep.mubr.bf16.mxu0 0
      %495 = vmatmul.mubr.bf16.gmra.mrb[0].mxu0 %v460
      %v496 = vpop.f32.mrb[0].mxu0
      %v497 = vadd.f32 %v433, %v496
      %v498 = vpop.f32.mrb[0].mxu0
      %v499 = vpop.f32.mrb[0].mxu0
      %v500 = vpop.f32.mrb[0].mxu0
      %501 = vdwg.mxu0
      %vm502 = vcmask 31744
      %503 = vst.msk [vmem:[%s273] sm:$0xff] %vm502, %v497
      %p504 = scmp.lt.s32.totalorder %s18, 1
      %s505 = scalar_select %p504, %s18, 1
      %s506 = smul.addr %s505, 8
      %s507 = scalar_lea.vmem %s7, %s506
      // Predicated region
      $region49: #{tpu_custom_call.1} parent=47 // pred_check
        %p508 = pneg %p188
      $region50: #{tpu_custom_call.1} parent=47 // pred_check_branch
        %510 = sbr.rel (%p508) target = $region52
      $region51: #{tpu_custom_call.1} parent=47 // pred_region
        _
      $region52: #{tpu_custom_call.1} parent=47 // pred_fallthru
        _
    $region48: #{tpu_custom_call.1} parent=5 // pred_fallthru
      _
    %p511 = scmp.le.s32.totalorder 2, %s13
    // Predicated region
    $region53: #{tpu_custom_call.1} parent=5 // pred_check
      %p512 = pneg %p511
    $region54: #{tpu_custom_call.1} parent=5 // pred_check_branch
      %514 = sbr.rel (%p512) target = $region56
    $region55: #{tpu_custom_call.1} parent=5 // pred_region
      %s515 = ssub.s32 %s13, 2
      // Predicated region
      $region57: #{tpu_custom_call.1} parent=55 // pred_check
        %p516 = pneg %p194
      $region58: #{tpu_custom_call.1} parent=55 // pred_check_branch
        %518 = sbr.rel (%p516) target = $region60
      $region59: #{tpu_custom_call.1} parent=55 // pred_region
        %p519 = scmp.lt.s32.totalorder %s19, 1
        %s520 = scalar_select %p519, %s19, 1
        %s521 = smul.addr %s520, 8
        %s522 = scalar_lea.vmem %s7, %s521
      $region60: #{tpu_custom_call.1} parent=55 // pred_fallthru
        _
    $region56: #{tpu_custom_call.1} parent=5 // pred_fallthru
      _
  $region6: #{tpu_custom_call.1} parent=0 // loop_footer
    %s17 = sadd.s32 1, %s13
  $region7: #{tpu_custom_call.1} parent=0 // loop_footer_branch
    %12 = sbr.rel target = $region3
  $region8: #{tpu_custom_call.1} parent=0 // loop_exit
    _

</llo_original>
